<compile_context>
chip_gen: v5e
topology: v5e:2x2
jax: 0.10.0
libtpu: 0.0.40
codegen_flags: <defaults>
</compile_context>

<pallas_src>
import jax
import jax.numpy as jnp
from jax.experimental import pallas as pl
from jax.experimental.pallas import tpu as pltpu

# ----- problem sizes (small, consistent with the module) -------------------
CIN, H, W = 4, 16, 16        # input images: (B, CIN, H, W) in NCHW
CFEAT     = 32               # feature channels from the conv backbone
NCLUSTERS = 16               # semantic head output classes
KH = KW   = 3                # conv kernel
KSZ       = KH * KW * CIN    # im2col contraction length = 36
HW        = H * W            # 256 spatial positions
OUTD      = 128              # lane-padded channel / cluster width
OUT2      = 2 * OUTD         # combined (fea | probs) output width


# ---------------------------------------------------------------------------
# Fused kernel: (im2col patches) -> conv matmul -> ReLU -> avg-pool (reduce)
#               -> head linear -> softmax.  One grid step per batch tile.
# ---------------------------------------------------------------------------
def _make_kernel(tb):
    def kernel(p_ref, wc_ref, bc_ref, wh_ref, bh_ref, out_ref):
        # p_ref  : (tb*HW, KSZ) bf16  im2col patches for tb batch elements
        # wc_ref : (KSZ, OUTD)  bf16  conv weight, out channels zero-padded to 128
        # bc_ref : (1, OUTD)    f32   conv bias (zero-padded)
        # wh_ref : (OUTD, OUTD) f32   head weight (zero-padded rows/cols)
        # bh_ref : (1, OUTD)    f32   head bias; padded lanes hold -1e30 => prob 0
        # out_ref: (1, tb, 2*OUTD)    [fea | probs], lane-dense

        # conv as a single K=36 MXU dot over the whole batch tile (f32 acc)
        acc = jnp.dot(p_ref[...], wc_ref[...],
                      preferred_element_type=jnp.float32)        # (tb*HW, 128)
        acc = jnp.maximum(acc + bc_ref[...], 0.0)                # bias + ReLU

        # global average pool: free major-dim reshape + reduction over spatial
        fea = jnp.mean(acc.reshape(tb, HW, OUTD), axis=1)        # (tb, 128)

        # semantic head: linear + exact softmax (padded lanes: -1e30 bias -> 0)
        logits = jnp.dot(fea, wh_ref[...],
                         preferred_element_type=jnp.float32) + bh_ref[...]
        m = jnp.max(logits, axis=-1, keepdims=True)
        e = jnp.exp(logits - m)
        probs = e / jnp.sum(e, axis=-1, keepdims=True)           # exact divide

        out_ref[0, :, :OUTD] = fea
        out_ref[0, :, OUTD:] = probs
    return kernel


def _batch_tile(b):
    # >= 2 grid steps whenever B >= 2 so the "parallel" batch axis can shard
    # across v7x's two TensorCores; tile capped at 64 so the f32 conv
    # intermediate (tb*HW, 128) (= tb * 128 KiB) plus double-buffered patch
    # blocks stay well inside v7x's 64 MiB VMEM.
    if b <= 1:
        return 1
    return min(64, (b + 1) // 2)


def _run_fused(patches, wc_p, bc_p, wh_p, bh_p, b_pad, tb):
    nsteps = b_pad // tb
    kernel = _make_kernel(tb)
    return pl.pallas_call(
        kernel,
        out_shape=jax.ShapeDtypeStruct((nsteps, tb, OUT2), jnp.float32),
        grid=(nsteps,),
        in_specs=[
            pl.BlockSpec((tb * HW, KSZ), lambda i: (i, 0)),
            pl.BlockSpec((KSZ, OUTD), lambda i: (0, 0)),
            pl.BlockSpec((1, OUTD), lambda i: (0, 0)),
            pl.BlockSpec((OUTD, OUTD), lambda i: (0, 0)),
            pl.BlockSpec((1, OUTD), lambda i: (0, 0)),
        ],
        out_specs=pl.BlockSpec((1, tb, OUT2), lambda i: (i, 0, 0)),
        compiler_params=pltpu.CompilerParams(
            dimension_semantics=("parallel",),
            vmem_limit_bytes=48 * 1024 * 1024),
    )(patches, wc_p, bc_p, wh_p, bh_p)


# ---------------------------------------------------------------------------
# Wrapper-side im2col (fused into the same jit/XLA executable as the kernel);
# patches are cast to bf16 to halve the dominant HBM traffic.
# ---------------------------------------------------------------------------
def _im2col(x_nchw):
    b = x_nchw.shape[0]
    x = jnp.transpose(x_nchw, (0, 2, 3, 1)).astype(jnp.float32)   # NCHW -> NHWC
    xp = jnp.pad(x, ((0, 0), (1, 1), (1, 1), (0, 0)))             # pad=1
    taps = [xp[:, kh:kh + H, kw:kw + W, :]
            for kh in range(KH) for kw in range(KW)]               # 9 x (b,H,W,CIN)
    patches = jnp.concatenate(taps, axis=-1)                       # (b,H,W,KSZ)
    return patches.reshape(b * HW, KSZ).astype(jnp.bfloat16)


@jax.jit
def _forward_impl(x_nchw, wc_p, bc_p, wh_p, bh_p):
    batch = x_nchw.shape[0]
    tb = _batch_tile(batch)
    b_pad = ((batch + tb - 1) // tb) * tb
    if b_pad != batch:                                  # masked tail via zero-pad
        x_nchw = jnp.pad(x_nchw,
                         ((0, b_pad - batch), (0, 0), (0, 0), (0, 0)))
    patches = _im2col(x_nchw)
    out = _run_fused(patches, wc_p, bc_p, wh_p, bh_p, b_pad, tb)
    out = out.reshape(b_pad, OUT2)
    fea = out[:batch, :CFEAT]
    probs = out[:batch, OUTD:OUTD + NCLUSTERS]
    return fea, probs


# ---------------------------------------------------------------------------
# Pure-JAX reference (for correctness checking only)
# ---------------------------------------------------------------------------
def _reference_forward(x_nchw, conv_w, conv_b, head_w, head_b):
    x = jnp.transpose(x_nchw, (0, 2, 3, 1)).astype(jnp.float32)
    y = jax.lax.conv_general_dilated(
        x, conv_w, window_strides=(1, 1), padding='SAME',
        dimension_numbers=('NHWC', 'HWIO', 'NHWC'),
        precision=jax.lax.Precision.HIGHEST)
    y = jnp.maximum(y + conv_b.reshape(1, 1, 1, CFEAT), 0.0)
    fea = jnp.mean(y, axis=(1, 2))
    logits = jnp.dot(fea, head_w, precision=jax.lax.Precision.HIGHEST) + head_b
    return fea, jax.nn.softmax(logits, axis=-1)


# ---------------------------------------------------------------------------
# Sim2Sem wrapper (mirrors the PyTorch forward control flow)
# ---------------------------------------------------------------------------
class Sim2SemPallas:
    def __init__(self, key):
        k1, k2 = jax.random.split(key, 2)
        self.conv_w = 0.1 * jax.random.normal(k1, (KH, KW, CIN, CFEAT), jnp.float32)
        self.conv_b = jnp.zeros((1, CFEAT), jnp.float32)
        self.head_w = 0.1 * jax.random.normal(k2, (CFEAT, NCLUSTERS), jnp.float32)
        self.head_b = jnp.zeros((1, NCLUSTERS), jnp.float32)

        # Lane-dense padded parameter copies for the fused kernel (built once).
        # Invariant: padded rows/cols of wc/wh and padded lanes of bc are zero,
        # padded lanes of bh are -1e30 (drives padded-cluster softmax to 0).
        wc = self.conv_w.reshape(KSZ, CFEAT)
        self._wc_p = jnp.pad(wc, ((0, 0), (0, OUTD - CFEAT))).astype(jnp.bfloat16)
        self._bc_p = jnp.pad(self.conv_b, ((0, 0), (0, OUTD - CFEAT)))
        self._wh_p = jnp.pad(self.head_w,
                             ((0, OUTD - CFEAT), (0, OUTD - NCLUSTERS)))
        self._bh_p = jnp.concatenate(
            [self.head_b, jnp.full((1, OUTD - NCLUSTERS), -1e30, jnp.float32)],
            axis=1)

    def _fea_probs(self, images_nchw):
        return _forward_impl(images_nchw, self._wc_p, self._bc_p,
                             self._wh_p, self._bh_p)

    def forward(self, images=None, forward_type='sem'):
        if forward_type not in ['sim2sem', 'proto', 'local_consistency']:
            if isinstance(images, list):
                # multi-crop branch: one fused pass over the concatenated batch
                num_heads = len(images)
                num_each = images[0].shape[0]
                image = jnp.concatenate(images, axis=0)
                fea_all, probs_all = self._fea_probs(image)
                fea = [fea_all[h * num_each:(h + 1) * num_each]
                       for h in range(num_heads)]
                probs = [probs_all[h * num_each:(h + 1) * num_each]
                         for h in range(num_heads)]
            else:
                fea, probs = self._fea_probs(images)

        if forward_type == 'sem':
            return probs            # head.forward(fea): per-row linear+softmax
        elif forward_type == 'feature_only':
            return fea
        # TODO(synk): 'sim2sem' (select_samples), 'proto', 'local_consistency'
        # and 'loss' dispatch into SPICE head internals that are not defined by
        # this module; they are not reproducible from the given code alone.
        else:
            raise TypeError


if __name__ == "__main__":
    key = jax.random.PRNGKey(0)
    k_param, k_x1, k_x2 = jax.random.split(key, 3)

    model = Sim2SemPallas(k_param)

    # single-tensor path (B=2, CIN=4, H=W=16), NCHW like PyTorch
    x = jax.random.normal(k_x1, (2, CIN, H, W), jnp.float32)
    probs = model.forward(images=x, forward_type='sem')
    probs = jax.block_until_ready(probs)
    assert probs.shape == (2, NCLUSTERS)

    # correctness vs pure-JAX f32 reference (bf16 MXU inputs => loose tolerance)
    fea_ref, probs_ref = _reference_forward(
        x, model.conv_w, model.conv_b, model.head_w, model.head_b)
    assert bool(jnp.allclose(probs, probs_ref, atol=1e-2, rtol=1e-2))
    # exact softmax divide -> rows sum to 1 up to f32 rounding
    assert bool(jnp.allclose(jnp.sum(probs, axis=-1), 1.0, atol=1e-3))

    # feature_only path
    fea = jax.block_until_ready(model.forward(images=x, forward_type='feature_only'))
    assert fea.shape == (2, CFEAT)
    assert bool(jnp.allclose(fea, fea_ref, atol=1e-2, rtol=1e-2))

    # list-of-images (multi-crop) path
    x2 = jax.random.normal(k_x2, (2, CIN, H, W), jnp.float32)
    probs_list = model.forward(images=[x, x2], forward_type='sem')
    probs_list = jax.block_until_ready(probs_list)
    assert len(probs_list) == 2 and probs_list[0].shape == (2, NCLUSTERS)
    assert bool(jnp.allclose(probs_list[0], probs_ref, atol=1e-2, rtol=1e-2))

    print("KERNEL_OK")
</pallas_src>

<mosaic_0001>
module attributes {stable_mosaic.version = 11 : i64} {
  func.func @kernel(%arg0: i32, %arg1: memref<256x36xbf16, #tpu.memory_space<vmem>>, %arg2: memref<36x128xbf16, #tpu.memory_space<vmem>>, %arg3: memref<1x128xf32, #tpu.memory_space<vmem>>, %arg4: memref<128x128xf32, #tpu.memory_space<vmem>>, %arg5: memref<1x128xf32, #tpu.memory_space<vmem>>, %arg6: memref<1x1x256xf32, #tpu.memory_space<vmem>>) attributes {dimension_semantics = [#tpu.dimension_semantics<parallel>], iteration_bounds = array<i64: 2>, scalar_prefetch = 0 : i64, scratch_operands = 0 : i64, tpu.core_type = #tpu.core_type<tc>, window_params = [{transform_indices = @transform_0, window_bounds = array<i64: 256, 36>}, {pipeline_mode = #tpu.pipeline_mode<synchronous>, transform_indices = @transform_1, window_bounds = array<i64: 36, 128>}, {pipeline_mode = #tpu.pipeline_mode<synchronous>, transform_indices = @transform_2, window_bounds = array<i64: 1, 128>}, {pipeline_mode = #tpu.pipeline_mode<synchronous>, transform_indices = @transform_3, window_bounds = array<i64: 128, 128>}, {pipeline_mode = #tpu.pipeline_mode<synchronous>, transform_indices = @transform_4, window_bounds = array<i64: 1, 128>}, {transform_indices = @transform_5, window_bounds = array<i64: 1, 1, 256>}]} {
    %c0 = arith.constant 0 : index
    %c0_0 = arith.constant 0 : index
    %0 = vector.load %arg1[%c0, %c0_0] : memref<256x36xbf16, #tpu.memory_space<vmem>>, vector<256x36xbf16>
    %c0_1 = arith.constant 0 : index
    %c0_2 = arith.constant 0 : index
    %1 = vector.load %arg2[%c0_1, %c0_2] : memref<36x128xbf16, #tpu.memory_space<vmem>>, vector<36x128xbf16>
    %cst = arith.constant dense<0.000000e+00> : vector<256x128xf32>
    %2 = tpu.matmul %0, %1, %cst {dimension_numbers = #tpu.dot_dimension_numbers<[1], [0], [0], [1], [0, 0, 1, 1], [], []>} : vector<256x36xbf16>, vector<36x128xbf16>, vector<256x128xf32> -> vector<256x128xf32>
    %c0_3 = arith.constant 0 : index
    %c0_4 = arith.constant 0 : index
    %3 = vector.load %arg3[%c0_3, %c0_4] : memref<1x128xf32, #tpu.memory_space<vmem>>, vector<1x128xf32>
    %4 = vector.broadcast %3 : vector<1x128xf32> to vector<256x128xf32>
    %5 = arith.addf %2, %4 : vector<256x128xf32>
    %cst_5 = arith.constant 0.000000e+00 : f32
    %6 = vector.broadcast %cst_5 : f32 to vector<256x128xf32>
    %7 = arith.maximumf %5, %6 : vector<256x128xf32>
    %8 = vector.shape_cast %7 : vector<256x128xf32> to vector<1x256x128xf32>
    %cst_6 = arith.constant dense<0.000000e+00> : vector<1x128xf32>
    %9 = vector.multi_reduction <add>, %8, %cst_6 [1] : vector<1x256x128xf32> to vector<1x128xf32>
    %cst_7 = arith.constant 2.560000e+02 : f32
    %10 = vector.broadcast %cst_7 : f32 to vector<1x128xf32>
    %11 = arith.divf %9, %10 : vector<1x128xf32>
    %c0_8 = arith.constant 0 : index
    %c0_9 = arith.constant 0 : index
    %12 = vector.load %arg4[%c0_8, %c0_9] : memref<128x128xf32, #tpu.memory_space<vmem>>, vector<128x128xf32>
    %cst_10 = arith.constant dense<0.000000e+00> : vector<1x128xf32>
    %13 = tpu.matmul %11, %12, %cst_10 {dimension_numbers = #tpu.dot_dimension_numbers<[1], [0], [0], [1], [0, 0, 1, 1], [], []>} : vector<1x128xf32>, vector<128x128xf32>, vector<1x128xf32> -> vector<1x128xf32>
    %c0_11 = arith.constant 0 : index
    %c0_12 = arith.constant 0 : index
    %14 = vector.load %arg5[%c0_11, %c0_12] : memref<1x128xf32, #tpu.memory_space<vmem>>, vector<1x128xf32>
    %15 = arith.addf %13, %14 : vector<1x128xf32>
    %cst_13 = arith.constant dense<0xFF800000> : vector<1xf32>
    %16 = vector.multi_reduction <maximumf>, %15, %cst_13 [1] : vector<1x128xf32> to vector<1xf32>
    %17 = vector.shape_cast %16 : vector<1xf32> to vector<1x1xf32>
    %18 = vector.broadcast %17 : vector<1x1xf32> to vector<1x128xf32>
    %19 = arith.subf %15, %18 : vector<1x128xf32>
    %20 = math.exp %19 : vector<1x128xf32>
    %cst_14 = arith.constant dense<0.000000e+00> : vector<1xf32>
    %21 = vector.multi_reduction <add>, %20, %cst_14 [1] : vector<1x128xf32> to vector<1xf32>
    %22 = vector.shape_cast %21 : vector<1xf32> to vector<1x1xf32>
    %23 = vector.broadcast %22 : vector<1x1xf32> to vector<1x128xf32>
    %24 = arith.divf %20, %23 : vector<1x128xf32>
    %c0_15 = arith.constant 0 : index
    %c0_16 = arith.constant 0 : index
    %c0_17 = arith.constant 0 : index
    %25 = vector.load %arg6[%c0_15, %c0_16, %c0_17] : memref<1x1x256xf32, #tpu.memory_space<vmem>>, vector<1x1x128xf32>
    %26 = vector.shape_cast %25 : vector<1x1x128xf32> to vector<1x128xf32>
    %27 = vector.shape_cast %11 : vector<1x128xf32> to vector<1x1x128xf32>
    tpu.vector_store %arg6[%c0_15, %c0_16, %c0_17], %27 {strides = array<i32>} : memref<1x1x256xf32, #tpu.memory_space<vmem>>, vector<1x1x128xf32>,
    %c0_18 = arith.constant 0 : index
    %c0_19 = arith.constant 0 : index
    %c128 = arith.constant 128 : index
    %28 = vector.load %arg6[%c0_18, %c0_19, %c128] : memref<1x1x256xf32, #tpu.memory_space<vmem>>, vector<1x1x128xf32>
    %29 = vector.shape_cast %28 : vector<1x1x128xf32> to vector<1x128xf32>
    %30 = vector.shape_cast %24 : vector<1x128xf32> to vector<1x1x128xf32>
    tpu.vector_store %arg6[%c0_18, %c0_19, %c128], %30 {strides = array<i32>} : memref<1x1x256xf32, #tpu.memory_space<vmem>>, vector<1x1x128xf32>,
    return
  }
  func.func @transform_0(%arg0: i32) -> (i32, i32) {
    %c0_i32 = arith.constant 0 : i32
    %c0_i32_0 = arith.constant 0 : i32
    return %arg0, %c0_i32 : i32, i32
  }
  func.func @transform_1(%arg0: i32) -> (i32, i32) {
    %c0_i32 = arith.constant 0 : i32
    %c0_i32_0 = arith.constant 0 : i32
    %c0_i32_1 = arith.constant 0 : i32
    return %c0_i32, %c0_i32_0 : i32, i32
  }
  func.func @transform_2(%arg0: i32) -> (i32, i32) {
    %c0_i32 = arith.constant 0 : i32
    %c0_i32_0 = arith.constant 0 : i32
    %c0_i32_1 = arith.constant 0 : i32
    return %c0_i32, %c0_i32_0 : i32, i32
  }
  func.func @transform_3(%arg0: i32) -> (i32, i32) {
    %c0_i32 = arith.constant 0 : i32
    %c0_i32_0 = arith.constant 0 : i32
    %c0_i32_1 = arith.constant 0 : i32
    return %c0_i32, %c0_i32_0 : i32, i32
  }
  func.func @transform_4(%arg0: i32) -> (i32, i32) {
    %c0_i32 = arith.constant 0 : i32
    %c0_i32_0 = arith.constant 0 : i32
    %c0_i32_1 = arith.constant 0 : i32
    return %c0_i32, %c0_i32_0 : i32, i32
  }
  func.func @transform_5(%arg0: i32) -> (i32, i32, i32) {
    %c0_i32 = arith.constant 0 : i32
    %c0_i32_0 = arith.constant 0 : i32
    %c0_i32_1 = arith.constant 0 : i32
    return %arg0, %c0_i32, %c0_i32_0 : i32, i32, i32
  }
}

</mosaic_0001>

<llo_original>
// kernel: _forward_impl.1
$region0: #{_forward_impl.1}
  #allocation0 [shape = 'u32[]', space=smem, size = 0x4, offset = 0x4, fixed_abs, tag = 'smem constant byte address 0x4 - core index']
  #allocation1 [shape = 'u32[72,128]{1,0:T(1,128)}', space=vmem, size = 0x9000, scoped, tag = 'internal scratch']
  %s0 = inlined_call_operand.vmem [shape: bf16[512,36], index: 0, kind: input, shape index: {}]
  %s1 = inlined_call_operand.vmem [shape: bf16[36,128], index: 1, kind: input, shape index: {}]
  %s2 = inlined_call_operand.vmem [shape: f32[1,128], index: 2, kind: input, shape index: {}]
  %s3 = inlined_call_operand.vmem [shape: f32[128,128], index: 3, kind: input, shape index: {}]
  %s4 = inlined_call_operand.vmem [shape: f32[1,128], index: 4, kind: input, shape index: {}]
  %s5 = inlined_call_operand.vmem [shape: f32[2,1,256], index: 5, kind: output, shape index: {}]
  %s6 = sld [smem:[#allocation0]]
  $region53: #{_forward_impl.1} parent=0
    _
  %s8 = ssub.s32 1, %s6
  %s9 = scalar_select 0, %s8, %s6
  loop: start=0, step=1, limit=4
  $region2: #{_forward_impl.1} parent=0 // loop_pre_header
    _
  $region3: #{_forward_impl.1} parent=0 // loop_header
    %s11 = sphi 0, %s15
    %p12 = scmp.ge.s32.totalorder %s11, 4
    %s21 = sphi 0, %s23
    %s24 = sphi 0, %s21
    %s25 = sphi 0, %s24
    %s41 = sphi 0, %s25
    %s45 = sphi 0, %s45
    %s47 = sphi 0, %s45
    %s48 = sphi 0, %s47
    %s62 = sphi 0, %s48
    %s66 = sphi 0, %s66
    %s68 = sphi 0, %s66
    %s69 = sphi 0, %s68
    %s83 = sphi 0, %s69
    %s87 = sphi 0, %s87
    %s89 = sphi 0, %s87
    %s90 = sphi 0, %s89
    %s104 = sphi 0, %s90
    %s108 = sphi 0, %s108
    %s110 = sphi 0, %s108
    %s111 = sphi 0, %s110
    %s125 = sphi 0, %s111
    %s131 = sphi 0, %s133
    %s134 = sphi 0, %s131
    %s135 = sphi 0, %s134
    %s151 = sphi 0, %s135
  $region4: #{_forward_impl.1} parent=0 // loop_header_branch
    %14 = sbr.rel (%p12) target = $region8
  $region5: #{_forward_impl.1} parent=0 // loop_body
    %s16 = ssub.s32 %s11, 1
    %s17 = ssub.s32 %s11, 2
    %s18 = sadd.s32 %s11, 1
    %s19 = ssub.s32 %s11, %s18
    %p20 = scmp.eq.s32.totalorder %s19, 0
    %s22 = sadd.s32 %s21, 1
    %s23 = scalar_select %p20, %s21, %s22
    %p26 = pneg %p20
    %p27 = scmp.eq.s32.totalorder %s11, 1
    %p28 = por %p26, %p27
    %p29 = scmp.ne.s32.totalorder %s21, %s24
    %p30 = scmp.eq.s32.totalorder %s11, 0
    %p31 = por %p29, %p30
    %p32 = scmp.ne.s32.totalorder %s21, %s24
    %p33 = scmp.eq.s32.totalorder %s16, 1
    %p34 = por %p32, %p33
    %p35 = scmp.ne.s32.totalorder %s24, %s25
    %p36 = scmp.eq.s32.totalorder %s16, 0
    %p37 = por %p35, %p36
    %p38 = scmp.ne.s32.totalorder %s24, %s25
    %p39 = scmp.eq.s32.totalorder %s17, 1
    %p40 = por %p38, %p39
    %p42 = scmp.ne.s32.totalorder %s25, %s41
    %p43 = scmp.eq.s32.totalorder %s17, 0
    %p44 = por %p42, %p43
    %s46 = sadd.s32 %s45, 1
    %p49 = scmp.eq.s32.totalorder %s11, 1
    %p50 = scmp.ne.s32.totalorder %s45, %s47
    %p51 = scmp.eq.s32.totalorder %s11, 0
    %p52 = por %p50, %p51
    %p53 = scmp.ne.s32.totalorder %s45, %s47
    %p54 = scmp.eq.s32.totalorder %s16, 1
    %p55 = por %p53, %p54
    %p56 = scmp.ne.s32.totalorder %s47, %s48
    %p57 = scmp.eq.s32.totalorder %s16, 0
    %p58 = por %p56, %p57
    %p59 = scmp.ne.s32.totalorder %s47, %s48
    %p60 = scmp.eq.s32.totalorder %s17, 1
    %p61 = por %p59, %p60
    %p63 = scmp.ne.s32.totalorder %s48, %s62
    %p64 = scmp.eq.s32.totalorder %s17, 0
    %p65 = por %p63, %p64
    %s67 = sadd.s32 %s66, 1
    %p70 = scmp.eq.s32.totalorder %s11, 1
    %p71 = scmp.ne.s32.totalorder %s66, %s68
    %p72 = scmp.eq.s32.totalorder %s11, 0
    %p73 = por %p71, %p72
    %p74 = scmp.ne.s32.totalorder %s66, %s68
    %p75 = scmp.eq.s32.totalorder %s16, 1
    %p76 = por %p74, %p75
    %p77 = scmp.ne.s32.totalorder %s68, %s69
    %p78 = scmp.eq.s32.totalorder %s16, 0
    %p79 = por %p77, %p78
    %p80 = scmp.ne.s32.totalorder %s68, %s69
    %p81 = scmp.eq.s32.totalorder %s17, 1
    %p82 = por %p80, %p81
    %p84 = scmp.ne.s32.totalorder %s69, %s83
    %p85 = scmp.eq.s32.totalorder %s17, 0
    %p86 = por %p84, %p85
    %s88 = sadd.s32 %s87, 1
    %p91 = scmp.eq.s32.totalorder %s11, 1
    %p92 = scmp.ne.s32.totalorder %s87, %s89
    %p93 = scmp.eq.s32.totalorder %s11, 0
    %p94 = por %p92, %p93
    %p95 = scmp.ne.s32.totalorder %s87, %s89
    %p96 = scmp.eq.s32.totalorder %s16, 1
    %p97 = por %p95, %p96
    %p98 = scmp.ne.s32.totalorder %s89, %s90
    %p99 = scmp.eq.s32.totalorder %s16, 0
    %p100 = por %p98, %p99
    %p101 = scmp.ne.s32.totalorder %s89, %s90
    %p102 = scmp.eq.s32.totalorder %s17, 1
    %p103 = por %p101, %p102
    %p105 = scmp.ne.s32.totalorder %s90, %s104
    %p106 = scmp.eq.s32.totalorder %s17, 0
    %p107 = por %p105, %p106
    %s109 = sadd.s32 %s108, 1
    %p112 = scmp.eq.s32.totalorder %s11, 1
    %p113 = scmp.ne.s32.totalorder %s108, %s110
    %p114 = scmp.eq.s32.totalorder %s11, 0
    %p115 = por %p113, %p114
    %p116 = scmp.ne.s32.totalorder %s108, %s110
    %p117 = scmp.eq.s32.totalorder %s16, 1
    %p118 = por %p116, %p117
    %p119 = scmp.ne.s32.totalorder %s110, %s111
    %p120 = scmp.eq.s32.totalorder %s16, 0
    %p121 = por %p119, %p120
    %p122 = scmp.ne.s32.totalorder %s110, %s111
    %p123 = scmp.eq.s32.totalorder %s17, 1
    %p124 = por %p122, %p123
    %p126 = scmp.ne.s32.totalorder %s111, %s125
    %p127 = scmp.eq.s32.totalorder %s17, 0
    %p128 = por %p126, %p127
    %s129 = ssub.s32 %s11, %s18
    %p130 = scmp.eq.s32.totalorder %s129, 0
    %s132 = sadd.s32 %s131, 1
    %s133 = scalar_select %p130, %s131, %s132
    %p136 = pneg %p130
    %p137 = scmp.eq.s32.totalorder %s11, 1
    %p138 = por %p136, %p137
    %p139 = scmp.ne.s32.totalorder %s131, %s134
    %p140 = scmp.eq.s32.totalorder %s11, 0
    %p141 = por %p139, %p140
    %p142 = scmp.ne.s32.totalorder %s131, %s134
    %p143 = scmp.eq.s32.totalorder %s16, 1
    %p144 = por %p142, %p143
    %p145 = scmp.ne.s32.totalorder %s134, %s135
    %p146 = scmp.eq.s32.totalorder %s16, 0
    %p147 = por %p145, %p146
    %p148 = scmp.ne.s32.totalorder %s134, %s135
    %p149 = scmp.eq.s32.totalorder %s17, 1
    %p150 = por %p148, %p149
    %p152 = scmp.ne.s32.totalorder %s135, %s151
    %p153 = scmp.eq.s32.totalorder %s17, 0
    %p154 = por %p152, %p153
    %p155 = scmp.le.s32.totalorder 1, %s11
    %p156 = scmp.lt.s32.totalorder %s11, 3
    %p157 = pnand %p155, %p156
    %p158 = pneg %p157
    // Predicated region
    $region9: #{_forward_impl.1} parent=5 // pred_check
      _
    $region10: #{_forward_impl.1} parent=5 // pred_check_branch
      %160 = sbr.rel (%p157) target = $region12
    $region11: #{_forward_impl.1} parent=5 // pred_region
      %s161 = ssub.s32 %s11, 1
      // Predicated region
      $region13: #{_forward_impl.1} parent=11 // pred_check
        %p162 = pneg %p58
      $region14: #{_forward_impl.1} parent=11 // pred_check_branch
        %164 = sbr.rel (%p162) target = $region16
      $region15: #{_forward_impl.1} parent=11 // pred_region
        _
      $region16: #{_forward_impl.1} parent=11 // pred_fallthru
        _
      // Predicated region
      $region17: #{_forward_impl.1} parent=11 // pred_check
        %p165 = pneg %p79
      $region18: #{_forward_impl.1} parent=11 // pred_check_branch
        %167 = sbr.rel (%p165) target = $region20
      $region19: #{_forward_impl.1} parent=11 // pred_region
        _
      $region20: #{_forward_impl.1} parent=11 // pred_fallthru
        _
      // Predicated region
      $region21: #{_forward_impl.1} parent=11 // pred_check
        %p168 = pneg %p100
      $region22: #{_forward_impl.1} parent=11 // pred_check_branch
        %170 = sbr.rel (%p168) target = $region24
      $region23: #{_forward_impl.1} parent=11 // pred_region
        _
      $region24: #{_forward_impl.1} parent=11 // pred_fallthru
        _
      // Predicated region
      $region25: #{_forward_impl.1} parent=11 // pred_check
        %p171 = pneg %p121
      $region26: #{_forward_impl.1} parent=11 // pred_check_branch
        %173 = sbr.rel (%p171) target = $region28
      $region27: #{_forward_impl.1} parent=11 // pred_region
        _
      $region28: #{_forward_impl.1} parent=11 // pred_fallthru
        _
    $region12: #{_forward_impl.1} parent=5 // pred_fallthru
      _
    %p174 = scmp.lt.s32.totalorder %s11, 2
    // Predicated region
    $region29: #{_forward_impl.1} parent=5 // pred_check
      %p175 = pneg %p174
    $region30: #{_forward_impl.1} parent=5 // pred_check_branch
      %177 = sbr.rel (%p175) target = $region32
    $region31: #{_forward_impl.1} parent=5 // pred_region
      // Predicated region
      $region33: #{_forward_impl.1} parent=31 // pred_check
        %p178 = pneg %p31
      $region34: #{_forward_impl.1} parent=31 // pred_check_branch
        %180 = sbr.rel (%p178) target = $region36
      $region35: #{_forward_impl.1} parent=31 // pred_region
        %s181 = smul.u32 32, %s11
        %p182 = scmp.lt.s32.totalorder %s181, 63
        %s183 = scalar_select %p182, %s181, 63
        %s184 = smul.addr %s183, 4
        %s185 = scalar_lea.vmem %s0, %s184
        %s186 = smul.u32 32, %s11
      $region36: #{_forward_impl.1} parent=31 // pred_fallthru
        _
    $region32: #{_forward_impl.1} parent=5 // pred_fallthru
      _
    %p187 = scmp.le.s32.totalorder 1, %s11
    %p188 = scmp.lt.s32.totalorder %s11, 3
    %p189 = pnand %p187, %p188
    %p190 = pneg %p189
    // Predicated region
    $region37: #{_forward_impl.1} parent=5 // pred_check
      _
    $region38: #{_forward_impl.1} parent=5 // pred_check_branch
      %192 = sbr.rel (%p189) target = $region40
    $region39: #{_forward_impl.1} parent=5 // pred_region
      %s193 = ssub.s32 %s11, 1
      %s194 = smul.u32 32, %s16
      %p195 = scmp.lt.s32.totalorder %s194, 63
      %s196 = scalar_select %p195, %s194, 63
      %s197 = smul.addr %s196, 4
      %s198 = scalar_lea.vmem %s0, %s197
      %p199 = pneg %p37
      %p200 = pneg %p34
      %p201 = pneg %p58
      %p202 = pneg %p55
      %p203 = pneg %p79
      %p204 = pneg %p76
      %p205 = pneg %p100
      %p206 = pneg %p97
      %p207 = pneg %p121
      %p208 = pneg %p118
      %p209 = pneg %p147
      %p210 = pneg %p144
      %p211 = scmp.lt.s32.totalorder %s16, 1
      %s212 = scalar_select %p211, %s16, 1
      %s213 = smul.addr %s212, 2
      %s214 = scalar_lea.vmem %s5, %s213
      %s215 = smul.u32 32, %s16
      %p216 = scmp.lt.s32.totalorder %s215, 63
      %s217 = scalar_select %p216, %s215, 63
      %s218 = smul.addr %s217, 4
      %s219 = scalar_lea.vmem %s0, %s218
      %s220 = smul.u32 32, %s16
      %p221 = scmp.lt.s32.totalorder %s16, 1
      %s222 = scalar_select %p221, %s16, 1
      %s223 = smul.addr %s222, 2
      %s224 = scalar_lea.vmem %s5, %s223
      %v226 = vld [vmem:[%s219] sm:$0xf]
      %v227 = vld [vmem:[%s219 + $0x4] sm:$0xf]
      %v228 = vld [vmem:[%s219 + $0x8] sm:$0xf]
      %v229 = vld [vmem:[%s219 + $0xc] sm:$0xf]
      %v230 = vld [vmem:[%s219 + $0x10] sm:$0xf]
      %v231 = vld [vmem:[%s219 + $0x14] sm:$0xf]
      %v232 = vld [vmem:[%s219 + $0x18] sm:$0xf]
      %v233 = vld [vmem:[%s219 + $0x1c] sm:$0xf]
      %v234 = vld [vmem:[%s219 + $0x20] sm:$0xf]
      %v235 = vld [vmem:[%s219 + $0x24] sm:$0xf]
      %v236 = vld [vmem:[%s219 + $0x28] sm:$0xf]
      %v237 = vld [vmem:[%s219 + $0x2c] sm:$0xf]
      %v238 = vld [vmem:[%s219 + $0x30] sm:$0xf]
      %v239 = vld [vmem:[%s219 + $0x34] sm:$0xf]
      %v240 = vld [vmem:[%s219 + $0x38] sm:$0xf]
      %v241 = vld [vmem:[%s219 + $0x3c] sm:$0xf]
      %v242 = vld [vmem:[%s219 + $0x40] sm:$0xf]
      %v243 = vld [vmem:[%s219 + $0x44] sm:$0xf]
      %v244 = vld [vmem:[%s219 + $0x48] sm:$0xf]
      %v245 = vld [vmem:[%s219 + $0x4c] sm:$0xf]
      %v246 = vld [vmem:[%s219 + $0x50] sm:$0xf]
      %v247 = vld [vmem:[%s219 + $0x54] sm:$0xf]
      %v248 = vld [vmem:[%s219 + $0x58] sm:$0xf]
      %v249 = vld [vmem:[%s219 + $0x5c] sm:$0xf]
      %v250 = vld [vmem:[%s219 + $0x60] sm:$0xf]
      %v251 = vld [vmem:[%s219 + $0x64] sm:$0xf]
      %v252 = vld [vmem:[%s219 + $0x68] sm:$0xf]
      %v253 = vld [vmem:[%s219 + $0x6c] sm:$0xf]
      %v254 = vld [vmem:[%s219 + $0x70] sm:$0xf]
      %v255 = vld [vmem:[%s219 + $0x74] sm:$0xf]
      %v256 = vld [vmem:[%s219 + $0x78] sm:$0xf]
      %v257 = vld [vmem:[%s219 + $0x7c] sm:$0xf]
      %v258 = vld [vmem:[%s1] sm:$0xf]
      %v259 = vld [vmem:[%s1 + $0x4] sm:$0xf]
      %v260 = vld [vmem:[%s1 + $0x8] sm:$0xf]
      %v261 = vld [vmem:[%s1 + $0xc] sm:$0xf]
      %v262 = vld [vmem:[%s1 + $0x10] sm:$0x3]
      %v263 = vld [vmem:[%s2] sm:$0x1]
      %v265 = vperm.slane %v263, 0
      %v299 = vunpack.c.l.b16 %v226
      %v300 = vunpack.c.l.b16 %v227
      %v301 = vunpack.c.l.b16 %v228
      %v302 = vunpack.c.l.b16 %v229
      %v303 = vunpack.c.l.b16 %v230
      %v304 = vunpack.c.l.b16 %v231
      %v305 = vunpack.c.l.b16 %v232
      %v306 = vunpack.c.l.b16 %v233
      %v307 = vunpack.c.l.b16 %v234
      %v308 = vunpack.c.l.b16 %v235
      %v309 = vunpack.c.l.b16 %v236
      %v310 = vunpack.c.l.b16 %v237
      %v311 = vunpack.c.l.b16 %v238
      %v312 = vunpack.c.l.b16 %v239
      %v313 = vunpack.c.l.b16 %v240
      %v314 = vunpack.c.l.b16 %v241
      %v315 = vunpack.c.l.b16 %v242
      %v316 = vunpack.c.l.b16 %v243
      %v317 = vunpack.c.l.b16 %v244
      %v318 = vunpack.c.l.b16 %v245
      %v319 = vunpack.c.l.b16 %v246
      %v320 = vunpack.c.l.b16 %v247
      %v321 = vunpack.c.l.b16 %v248
      %v322 = vunpack.c.l.b16 %v249
      %v323 = vunpack.c.l.b16 %v250
      %v324 = vunpack.c.l.b16 %v251
      %v325 = vunpack.c.l.b16 %v252
      %v326 = vunpack.c.l.b16 %v253
      %v327 = vunpack.c.l.b16 %v254
      %v328 = vunpack.c.l.b16 %v255
      %v329 = vunpack.c.l.b16 %v256
      %v330 = vunpack.c.l.b16 %v257
      %v331 = vpack.c.b16 %v300, %v299
      %v332 = vpack.c.b16 %v302, %v301
      %v333 = vpack.c.b16 %v304, %v303
      %v334 = vpack.c.b16 %v306, %v305
      %v335 = vpack.c.b16 %v308, %v307
      %v336 = vpack.c.b16 %v310, %v309
      %v337 = vpack.c.b16 %v312, %v311
      %v338 = vpack.c.b16 %v314, %v313
      %v339 = vpack.c.b16 %v316, %v315
      %v340 = vpack.c.b16 %v318, %v317
      %v341 = vpack.c.b16 %v320, %v319
      %v342 = vpack.c.b16 %v322, %v321
      %v343 = vpack.c.b16 %v324, %v323
      %v344 = vpack.c.b16 %v326, %v325
      %v345 = vpack.c.b16 %v328, %v327
      %v346 = vpack.c.b16 %v330, %v329
      %v352 = vunpack.c.l.b16 %v258
      %v353 = vunpack.c.l.b16 %v259
      %v354 = vunpack.c.l.b16 %v260
      %v355 = vunpack.c.l.b16 %v261
      %v356 = vunpack.c.l.b16 %v262
      %v357 = vpack.c.b16 %v353, %v352
      %v358 = vpack.c.b16 %v355, %v354
      %v359 = vpack.c.b16 %v356, %v356
      %vm362 = vcmask 293888
      %v364 = vsel %vm362, %v331, 0
      %v367 = vsel %vm362, %v332, 0
      %v370 = vsel %vm362, %v333, 0
      %v373 = vsel %vm362, %v334, 0
      %v376 = vsel %vm362, %v335, 0
      %v379 = vsel %vm362, %v336, 0
      %v382 = vsel %vm362, %v337, 0
      %v385 = vsel %vm362, %v338, 0
      %v388 = vsel %vm362, %v339, 0
      %v391 = vsel %vm362, %v340, 0
      %v394 = vsel %vm362, %v341, 0
      %v397 = vsel %vm362, %v342, 0
      %v400 = vsel %vm362, %v343, 0
      %v403 = vsel %vm362, %v344, 0
      %v406 = vsel %vm362, %v345, 0
      %v409 = vsel %vm362, %v346, 0
      %vm411 = vcmask 1041408
      %v413 = vsel %vm411, %v359, 0
      %415 = vmatpush.bf16.msra.mxu0 0
      %416 = vmatpush.bf16.msra.mxu0 0
      %417 = vmatpush.bf16.msra.mxu0 0
      %418 = vmatpush.bf16.msra.mxu0 0
      %419 = vmatpush.bf16.msra.mxu0 0
      %420 = vmatpush.bf16.msra.mxu0 %v413
      %421 = vmatpush.bf16.msra.mxu0 %v358
      %422 = vmatpush.bf16.msra.mxu0 %v357
      %423 = vmatmul.bf16.gmra.mxu0 %v364
      %v424 = vpop.f32.mrf.mxu0
      %v425 = vadd.f32 %v265, %v424
      %v426 = vpop.f32.mrf.mxu0
      %v427 = vadd.f32 %v265, %v426
      %428 = vmatmul.bf16.gmra.mxu0 %v367
      %v429 = vpop.f32.mrf.mxu0
      %v430 = vadd.f32 %v265, %v429
      %v431 = vpop.f32.mrf.mxu0
      %v432 = vadd.f32 %v265, %v431
      %433 = vmatmul.bf16.gmra.mxu0 %v370
      %v434 = vpop.f32.mrf.mxu0
      %v435 = vadd.f32 %v265, %v434
      %v436 = vpop.f32.mrf.mxu0
      %v437 = vadd.f32 %v265, %v436
      %438 = vmatmul.bf16.gmra.mxu0 %v373
      %v439 = vpop.f32.mrf.mxu0
      %v440 = vadd.f32 %v265, %v439
      %v441 = vpop.f32.mrf.mxu0
      %v442 = vadd.f32 %v265, %v441
      %443 = vmatmul.bf16.gmra.mxu0 %v376
      %v444 = vpop.f32.mrf.mxu0
      %v445 = vadd.f32 %v265, %v444
      %v446 = vpop.f32.mrf.mxu0
      %v447 = vadd.f32 %v265, %v446
      %448 = vmatmul.bf16.gmra.mxu0 %v379
      %v449 = vpop.f32.mrf.mxu0
      %v450 = vadd.f32 %v265, %v449
      %v451 = vpop.f32.mrf.mxu0
      %v452 = vadd.f32 %v265, %v451
      %453 = vmatmul.bf16.gmra.mxu0 %v382
      %v454 = vpop.f32.mrf.mxu0
      %v455 = vadd.f32 %v265, %v454
      %v456 = vpop.f32.mrf.mxu0
      %v457 = vadd.f32 %v265, %v456
      %458 = vmatmul.bf16.gmra.mxu0 %v385
      %v459 = vpop.f32.mrf.mxu0
      %v460 = vadd.f32 %v265, %v459
      %v461 = vpop.f32.mrf.mxu0
      %v462 = vadd.f32 %v265, %v461
      %463 = vmatmul.bf16.gmra.mxu0 %v388
      %v464 = vpop.f32.mrf.mxu0
      %v465 = vadd.f32 %v265, %v464
      %v466 = vpop.f32.mrf.mxu0
      %v467 = vadd.f32 %v265, %v466
      %468 = vmatmul.bf16.gmra.mxu0 %v391
      %v469 = vpop.f32.mrf.mxu0
      %v470 = vadd.f32 %v265, %v469
      %v471 = vpop.f32.mrf.mxu0
      %v472 = vadd.f32 %v265, %v471
      %473 = vmatmul.bf16.gmra.mxu0 %v394
      %v474 = vpop.f32.mrf.mxu0
      %v475 = vadd.f32 %v265, %v474
      %v476 = vpop.f32.mrf.mxu0
      %v477 = vadd.f32 %v265, %v476
      %478 = vmatmul.bf16.gmra.mxu0 %v397
      %v479 = vpop.f32.mrf.mxu0
      %v480 = vadd.f32 %v265, %v479
      %v481 = vpop.f32.mrf.mxu0
      %v482 = vadd.f32 %v265, %v481
      %483 = vmatmul.bf16.gmra.mxu0 %v400
      %v484 = vpop.f32.mrf.mxu0
      %v485 = vadd.f32 %v265, %v484
      %v486 = vpop.f32.mrf.mxu0
      %v487 = vadd.f32 %v265, %v486
      %488 = vmatmul.bf16.gmra.mxu0 %v403
      %v489 = vpop.f32.mrf.mxu0
      %v490 = vadd.f32 %v265, %v489
      %v491 = vpop.f32.mrf.mxu0
      %v492 = vadd.f32 %v265, %v491
      %493 = vmatmul.bf16.gmra.mxu0 %v406
      %v494 = vpop.f32.mrf.mxu0
      %v495 = vadd.f32 %v265, %v494
      %v496 = vpop.f32.mrf.mxu0
      %v497 = vadd.f32 %v265, %v496
      %498 = vmatmul.bf16.gmra.mxu0 %v409
      %v499 = vpop.f32.mrf.mxu0
      %v500 = vadd.f32 %v265, %v499
      %v501 = vpop.f32.mrf.mxu0
      %v502 = vadd.f32 %v265, %v501
      %503 = vdwg.mxu0
      %v504 = vmax.f32 %v425, 0.0
      %v505 = vmax.f32 %v427, 0.0
      %v506 = vmax.f32 %v430, 0.0
      %v507 = vmax.f32 %v432, 0.0
      %v508 = vmax.f32 %v435, 0.0
      %v509 = vmax.f32 %v437, 0.0
      %v510 = vmax.f32 %v440, 0.0
      %v511 = vmax.f32 %v442, 0.0
      %v512 = vmax.f32 %v445, 0.0
      %v513 = vmax.f32 %v447, 0.0
      %v514 = vmax.f32 %v450, 0.0
      %v515 = vmax.f32 %v452, 0.0
      %v516 = vmax.f32 %v455, 0.0
      %v517 = vmax.f32 %v457, 0.0
      %v518 = vmax.f32 %v460, 0.0
      %v519 = vmax.f32 %v462, 0.0
      %v520 = vmax.f32 %v465, 0.0
      %v521 = vmax.f32 %v467, 0.0
      %v522 = vmax.f32 %v470, 0.0
      %v523 = vmax.f32 %v472, 0.0
      %v524 = vmax.f32 %v475, 0.0
      %v525 = vmax.f32 %v477, 0.0
      %v526 = vmax.f32 %v480, 0.0
      %v527 = vmax.f32 %v482, 0.0
      %v528 = vmax.f32 %v485, 0.0
      %v529 = vmax.f32 %v487, 0.0
      %v530 = vmax.f32 %v490, 0.0
      %v531 = vmax.f32 %v492, 0.0
      %v532 = vmax.f32 %v495, 0.0
      %v533 = vmax.f32 %v497, 0.0
      %v534 = vmax.f32 %v500, 0.0
      %v535 = vmax.f32 %v502, 0.0
      %v536 = vadd.f32 %v504, %v505
      %v537 = vadd.f32 %v536, %v506
      %v538 = vadd.f32 %v537, %v507
      %v539 = vadd.f32 %v538, %v508
      %v540 = vadd.f32 %v539, %v509
      %v541 = vadd.f32 %v540, %v510
      %v542 = vadd.f32 %v541, %v511
      %v543 = vadd.f32 %v542, %v512
      %v544 = vadd.f32 %v543, %v513
      %v545 = vadd.f32 %v544, %v514
      %v546 = vadd.f32 %v545, %v515
      %v547 = vadd.f32 %v546, %v516
      %v548 = vadd.f32 %v547, %v517
      %v549 = vadd.f32 %v548, %v518
      %v550 = vadd.f32 %v549, %v519
      %v551 = vadd.f32 %v550, %v520
      %v552 = vadd.f32 %v551, %v521
      %v553 = vadd.f32 %v552, %v522
      %v554 = vadd.f32 %v553, %v523
      %v555 = vadd.f32 %v554, %v524
      %v556 = vadd.f32 %v555, %v525
      %v557 = vadd.f32 %v556, %v526
      %v558 = vadd.f32 %v557, %v527
      %v559 = vadd.f32 %v558, %v528
      %v560 = vadd.f32 %v559, %v529
      %v561 = vadd.f32 %v560, %v530
      %v562 = vadd.f32 %v561, %v531
      %v563 = vadd.f32 %v562, %v532
      %v564 = vadd.f32 %v563, %v533
      %v565 = vadd.f32 %v564, %v534
      %v566 = vadd.f32 %v565, %v535
      %v567 = vrot.slane %v566, 4
      %v568 = vadd.f32 %v566, %v567
      %v569 = vrot.slane %v568, 2
      %v570 = vadd.f32 %v568, %v569
      %v571 = vrot.slane %v570, 1
      %v572 = vadd.f32 %v570, %v571
      %v573 = vrcp.pop 256.0
      %v574 = vmul.f32 256.0, %v573
      %v575 = vsub.f32 1.0, %v574
      %v576 = vmul.f32 %v573, %v575
      %v577 = vadd.f32 %v573, %v576
      %vm578 = vweird.f32 %v573
      %v579 = vsel %vm578, %v573, %v577
      %v580 = vmul.f32 %v572, %v579
      %v581 = vld [vmem:[%s3] sm:$0xff]
      %v582 = vld [vmem:[%s3 + $0x8] sm:$0xff]
      %v583 = vld [vmem:[%s3 + $0x10] sm:$0xff]
      %v584 = vld [vmem:[%s3 + $0x18] sm:$0xff]
      %v585 = vld [vmem:[%s3 + $0x20] sm:$0xff]
      %v586 = vld [vmem:[%s3 + $0x28] sm:$0xff]
      %v587 = vld [vmem:[%s3 + $0x30] sm:$0xff]
      %v588 = vld [vmem:[%s3 + $0x38] sm:$0xff]
      %v589 = vld [vmem:[%s3 + $0x40] sm:$0xff]
      %v590 = vld [vmem:[%s3 + $0x48] sm:$0xff]
      %v591 = vld [vmem:[%s3 + $0x50] sm:$0xff]
      %v592 = vld [vmem:[%s3 + $0x58] sm:$0xff]
      %v593 = vld [vmem:[%s3 + $0x60] sm:$0xff]
      %v594 = vld [vmem:[%s3 + $0x68] sm:$0xff]
      %v595 = vld [vmem:[%s3 + $0x70] sm:$0xff]
      %v596 = vld [vmem:[%s3 + $0x78] sm:$0xff]
      %v597 = vld [vmem:[%s4] sm:$0x1]
      %598 = vmatpush.msra.mxu0 %v596
      %599 = vmatpush.msra.mxu0 %v595
      %600 = vmatpush.msra.mxu0 %v594
      %601 = vmatpush.msra.mxu0 %v593
      %602 = vmatpush.msra.mxu0 %v592
      %603 = vmatpush.msra.mxu0 %v591
      %604 = vmatpush.msra.mxu0 %v590
      %605 = vmatpush.msra.mxu0 %v589
      %606 = vmatpush.msra.mxu0 %v588
      %607 = vmatpush.msra.mxu0 %v587
      %608 = vmatpush.msra.mxu0 %v586
      %609 = vmatpush.msra.mxu0 %v585
      %610 = vmatpush.msra.mxu0 %v584
      %611 = vmatpush.msra.mxu0 %v583
      %612 = vmatpush.msra.mxu0 %v582
      %613 = vmatpush.msra.mxu0 %v581
      %614 = vmatmul.f32.gmra.mxu0 %v580
      %v615 = vpop.f32.mrf.mxu0
      %v616 = vadd.f32 %v597, %v615
      %617 = vdwg.mxu0
      %vm618 = vcmask 1040384
      %v619 = vsel %vm618, %v616, -inf
      %620 = vmax.xlane.f32.xlu0 %v619
      %v621 = vpop.xlane.xlu0 %620
      %v622 = vsub.f32 %v616, %v621
      %v623 = vmul.f32 %v622, 1.442695
      %v624 = vpow.pop %v623
      %v625 = vsel %vm618, %v624, 0.0
      %626 = vadd.xlane.f32.xlu0 %v625
      %v627 = vpop.xlane.xlu0 %626
      %v628 = vrcp.pop %v627
      %v629 = vmul.f32 %v627, %v628
      %v630 = vsub.f32 1.0, %v629
      %v631 = vmul.f32 %v628, %v630
      %v632 = vadd.f32 %v628, %v631
      %vm633 = vweird.f32 %v627
      %vm634 = vweird.f32 %v628
      %vm635 = vmor %vm633, %vm634
      %v636 = vsel %vm635, %v628, %v632
      %v637 = vand.u32 2147483647, %v627
      %vm638 = vcmp.eq.f32.partialorder %v637, 8.507059e+37
      %v639 = vand.u32 %v627, 2147483648
      %v640 = vor.u32 1.1754944e-38, %v639
      %v641 = vsel %vm638, %v640, %v636
      %v642 = vmul.f32 %v624, %v641
      %v643 = vlaneseq
      %vm644 = vcmp.ge.s32.totalorder %v643, 0
      %vm645 = vcmp.lt.s32.totalorder %v643, 128
      %vm646 = vmand %vm644, %vm645
      %647 = vst.msk [vmem:[%s224] sm:$0x1] %vm646, %v580
      %648 = vst.msk [vmem:[%s224 + $0x1] sm:$0x1] %vm646, %v642
      %p649 = scmp.lt.s32.totalorder %s16, 1
      %s650 = scalar_select %p649, %s16, 1
      %s651 = smul.addr %s650, 2
      %s652 = scalar_lea.vmem %s5, %s651
      // Predicated region
      $region41: #{_forward_impl.1} parent=39 // pred_check
        %p653 = pneg %p144
      $region42: #{_forward_impl.1} parent=39 // pred_check_branch
        %655 = sbr.rel (%p653) target = $region44
      $region43: #{_forward_impl.1} parent=39 // pred_region
        _
      $region44: #{_forward_impl.1} parent=39 // pred_fallthru
        _
    $region40: #{_forward_impl.1} parent=5 // pred_fallthru
      _
    %p656 = scmp.le.s32.totalorder 2, %s11
    // Predicated region
    $region45: #{_forward_impl.1} parent=5 // pred_check
      %p657 = pneg %p656
    $region46: #{_forward_impl.1} parent=5 // pred_check_branch
      %659 = sbr.rel (%p657) target = $region48
    $region47: #{_forward_impl.1} parent=5 // pred_region
      %s660 = ssub.s32 %s11, 2
      // Predicated region
      $region49: #{_forward_impl.1} parent=47 // pred_check
        %p661 = pneg %p150
      $region50: #{_forward_impl.1} parent=47 // pred_check_branch
        %663 = sbr.rel (%p661) target = $region52
      $region51: #{_forward_impl.1} parent=47 // pred_region
        %p664 = scmp.lt.s32.totalorder %s17, 1
        %s665 = scalar_select %p664, %s17, 1
        %s666 = smul.addr %s665, 2
        %s667 = scalar_lea.vmem %s5, %s666
      $region52: #{_forward_impl.1} parent=47 // pred_fallthru
        _
    $region48: #{_forward_impl.1} parent=5 // pred_fallthru
      _
  $region6: #{_forward_impl.1} parent=0 // loop_footer
    %s15 = sadd.s32 1, %s11
  $region7: #{_forward_impl.1} parent=0 // loop_footer_branch
    %10 = sbr.rel target = $region3
  $region8: #{_forward_impl.1} parent=0 // loop_exit
    _

</llo_original>
